<compile_context>
chip_gen: v7x
topology: tpu7x:2x2x1
jax: 0.10.0
libtpu: 0.0.40
codegen_flags: <defaults>
</compile_context>

<pallas_src>
import functools

import numpy as np

import jax
import jax.numpy as jnp
from jax.experimental import pallas as pl
from jax.experimental.pallas import tpu as pltpu

LANE = 128
_BN_EPS = 1e-5


def _round_up(x, m):
    return (x + m - 1) // m * m


def _pad2(a, rows, cols):
    return jnp.pad(a, ((0, rows - a.shape[0]), (0, cols - a.shape[1])))


# ---------------------------------------------------------------------------
# Hardware-aware tiling / VMEM budgeting
# ---------------------------------------------------------------------------
def _hw_config():
    vmem_cap = 64 << 20                      # conservative default (v7x-like)
    try:
        vmem_cap = int(pltpu.get_tpu_info().vmem_capacity_bytes)
    except Exception:
        pass
    big_vmem = vmem_cap >= (96 << 20)        # v5e / v6e: 128 MiB, v7x: 64 MiB
    tm_target = 1024 if big_vmem else 512
    tk_target = 2048 if big_vmem else 1024
    return vmem_cap, tm_target, tk_target


def _select_tiles(n):
    vmem_cap, tm_t, tk_t = _hw_config()
    n128 = _round_up(max(n, 1), LANE)
    # Largest power-of-two multiple of 128 that fits both the target and the graph.
    tk = LANE
    while tk * 2 <= min(tk_t, n128):
        tk *= 2
    # Don't let tile-rounding inflate the node count by more than ~25 %.
    while tk > LANE and _round_up(n128, tk) > int(n128 * 1.25):
        tk //= 2
    n_pad = _round_up(n128, tk)
    tm = min(tm_t, tk)                       # tm | tk | n_pad (powers of two)
    # Keep >= 2 dst blocks so the 'parallel' axis feeds both v7x TensorCores.
    if n_pad // tm < 2 and tm > LANE:
        tm //= 2
    return n_pad, tm, tk, vmem_cap


def _vmem_limit(byte_terms, vmem_cap):
    total = sum(byte_terms)
    limit = max(32 << 20, int(total * 1.5) + (8 << 20))
    return int(min(limit, vmem_cap - (8 << 20)))


# ---------------------------------------------------------------------------
# Host-side block-sparse schedule: for each dst block, the list of src blocks
# whose adjacency tile has at least one edge.  Needs concrete edge_index.
# TODO(synk): under jit with a traced/dynamic graph, recompute this schedule
# host-side whenever the graph changes (the grid must stay static).
# ---------------------------------------------------------------------------
def _block_schedule(edge_index, n_pad, tm, tk):
    ei = np.asarray(jax.device_get(edge_index))
    src, dst = ei[0], ei[1]
    nbi, nbk = n_pad // tm, n_pad // tk
    occ = np.zeros((nbi, nbk), dtype=bool)
    if src.size:
        occ[dst // tm, src // tk] = True
    nnz = occ.sum(axis=1).astype(np.int32)
    max_nnz = max(int(nnz.max()) if nnz.size else 0, 1)
    sched = np.zeros((nbi, max_nnz), dtype=np.int32)
    for i in range(nbi):
        cols = np.nonzero(occ[i])[0]
        if cols.size:
            sched[i, :cols.size] = cols
            sched[i, cols.size:] = cols[-1]   # padded steps re-fetch, but are skipped
    return jnp.asarray(sched), jnp.asarray(nnz)


# ---------------------------------------------------------------------------
# Kernel 1: one GraphConv layer (BN folded into W/b), fused ReLU.
# Grid = (dst blocks, scheduled src blocks); src axis is a reduction into a
# f32 VMEM scratch; empty adjacency tiles are skipped via the schedule.
# ---------------------------------------------------------------------------
def _graph_conv_kernel(sched_ref, nnz_ref, a_ref, xs_ref, xd_ref,
                       wr_ref, ws_ref, b_ref, o_ref, acc_ref, *, apply_relu):
    i = pl.program_id(0)
    j = pl.program_id(1)

    @pl.when(j == 0)
    def _():
        acc_ref[...] = jnp.zeros_like(acc_ref)

    @pl.when(j < nnz_ref[i])                      # skip all-zero A tiles
    def _():
        acc_ref[...] += jnp.dot(a_ref[...], xs_ref[...],
                                preferred_element_type=jnp.float32)

    @pl.when(j == pl.num_programs(1) - 1)
    def _():
        # Two 128-contraction dots (no concat temp): agg@W_rel + x_dst@W_root + b
        y = jnp.dot(acc_ref[...].astype(jnp.bfloat16), wr_ref[...],
                    preferred_element_type=jnp.float32)
        y = y + jnp.dot(xd_ref[...], ws_ref[...],
                        preferred_element_type=jnp.float32)
        y = y + b_ref[...]
        if apply_relu:
            y = jnp.maximum(y, 0.0)
        o_ref[...] = y.astype(o_ref.dtype)


def _graph_conv_layer(sched, nnz, a, h, w_rel, w_root, b, *, apply_relu,
                      out_dtype, tm, tk, vmem_cap):
    n_pad = a.shape[0]
    cin_p = h.shape[1]
    cout_p = w_rel.shape[1]
    nbi = n_pad // tm
    max_nnz = sched.shape[1]
    out_isz = jnp.dtype(out_dtype).itemsize

    flops = 2 * nbi * max_nnz * tm * tk * cin_p + 4 * n_pad * cin_p * cout_p
    bytes_accessed = (nbi * max_nnz * tm * tk * 2
                      + nbi * max_nnz * tk * cin_p * 2
                      + n_pad * cin_p * 2
                      + 2 * cin_p * cout_p * 2
                      + n_pad * cout_p * out_isz)

    vmem = _vmem_limit([
        2 * tm * tk * 2,            # A tiles, double-buffered bf16
        2 * tk * cin_p * 2,         # h (src) tiles
        2 * tm * cin_p * 2,         # h (dst) tiles
        2 * tm * cout_p * out_isz,  # output tiles
        2 * 2 * cin_p * cout_p * 2,  # W_rel + W_root (grid-invariant)
        2 * cout_p * 4,             # bias
        tm * cin_p * 4,             # f32 accumulator scratch
    ], vmem_cap)

    kernel = functools.partial(_graph_conv_kernel, apply_relu=apply_relu)
    return pl.pallas_call(
        kernel,
        out_shape=jax.ShapeDtypeStruct((n_pad, cout_p), out_dtype),
        grid_spec=pltpu.PrefetchScalarGridSpec(
            num_scalar_prefetch=2,
            grid=(nbi, max_nnz),
            in_specs=[
                pl.BlockSpec((tm, tk), lambda i, j, s, n: (i, s[i, j])),
                pl.BlockSpec((tk, cin_p), lambda i, j, s, n: (s[i, j], 0)),
                pl.BlockSpec((tm, cin_p), lambda i, j, s, n: (i, 0)),
                pl.BlockSpec((cin_p, cout_p), lambda i, j, s, n: (0, 0)),
                pl.BlockSpec((cin_p, cout_p), lambda i, j, s, n: (0, 0)),
                pl.BlockSpec((1, cout_p), lambda i, j, s, n: (0, 0)),
            ],
            out_specs=pl.BlockSpec((tm, cout_p), lambda i, j, s, n: (i, 0)),
            scratch_shapes=[pltpu.VMEM((tm, cin_p), jnp.float32)],
        ),
        compiler_params=pltpu.CompilerParams(
            dimension_semantics=("parallel", "arbitrary"),
            vmem_limit_bytes=vmem,
        ),
        cost_estimate=pl.CostEstimate(flops=flops, transcendentals=0,
                                      bytes_accessed=bytes_accessed),
    )(sched, nnz, a, h, h, w_rel, w_root, b)


# ---------------------------------------------------------------------------
# Kernel 2: layer-3 GraphConv fused with global_mean_pool + final Linear.
# Each dst block writes its (G_pad, COUT_pad) partial pooled contribution; the
# tiny per-block partials are summed (and biased) outside the kernel, so the
# full layer-3 activation never round-trips through HBM.
# ---------------------------------------------------------------------------
def _graph_conv_pool_kernel(sched_ref, nnz_ref, a_ref, xs_ref, xd_ref,
                            wr_ref, ws_ref, b_ref, p_ref, lw_ref,
                            o_ref, acc_ref):
    i = pl.program_id(0)
    j = pl.program_id(1)

    @pl.when(j == 0)
    def _():
        acc_ref[...] = jnp.zeros_like(acc_ref)

    @pl.when(j < nnz_ref[i])
    def _():
        acc_ref[...] += jnp.dot(a_ref[...], xs_ref[...],
                                preferred_element_type=jnp.float32)

    @pl.when(j == pl.num_programs(1) - 1)
    def _():
        y = jnp.dot(acc_ref[...].astype(jnp.bfloat16), wr_ref[...],
                    preferred_element_type=jnp.float32)
        y = y + jnp.dot(xd_ref[...], ws_ref[...],
                        preferred_element_type=jnp.float32)
        y = y + b_ref[...]
        # global_mean_pool restricted to this dst block, then final Linear.
        pooled = jnp.dot(p_ref[...], y, preferred_element_type=jnp.float32)
        o_ref[0] = jnp.dot(pooled, lw_ref[...],
                           preferred_element_type=jnp.float32)


def _graph_conv_pool_layer(sched, nnz, a, h, w_rel, w_root, b, pool, lw, *,
                           tm, tk, vmem_cap):
    n_pad = a.shape[0]
    cin_p = h.shape[1]
    cout_p = w_rel.shape[1]
    g_p = pool.shape[0]
    lout_p = lw.shape[1]
    nbi = n_pad // tm
    max_nnz = sched.shape[1]

    vmem = _vmem_limit([
        2 * tm * tk * 2,
        2 * tk * cin_p * 2,
        2 * tm * cin_p * 2,
        2 * g_p * lout_p * 4,
        2 * 2 * cin_p * cout_p * 2,
        2 * cout_p * 4,
        2 * g_p * tm * 4,
        2 * cout_p * lout_p * 4,
        tm * cin_p * 4,
    ], vmem_cap)

    partials = pl.pallas_call(
        _graph_conv_pool_kernel,
        out_shape=jax.ShapeDtypeStruct((nbi, g_p, lout_p), jnp.float32),
        grid_spec=pltpu.PrefetchScalarGridSpec(
            num_scalar_prefetch=2,
            grid=(nbi, max_nnz),
            in_specs=[
                pl.BlockSpec((tm, tk), lambda i, j, s, n: (i, s[i, j])),
                pl.BlockSpec((tk, cin_p), lambda i, j, s, n: (s[i, j], 0)),
                pl.BlockSpec((tm, cin_p), lambda i, j, s, n: (i, 0)),
                pl.BlockSpec((cin_p, cout_p), lambda i, j, s, n: (0, 0)),
                pl.BlockSpec((cin_p, cout_p), lambda i, j, s, n: (0, 0)),
                pl.BlockSpec((1, cout_p), lambda i, j, s, n: (0, 0)),
                pl.BlockSpec((g_p, tm), lambda i, j, s, n: (0, i)),
                pl.BlockSpec((cout_p, lout_p), lambda i, j, s, n: (0, 0)),
            ],
            out_specs=pl.BlockSpec((1, g_p, lout_p),
                                   lambda i, j, s, n: (i, 0, 0)),
            scratch_shapes=[pltpu.VMEM((tm, cin_p), jnp.float32)],
        ),
        compiler_params=pltpu.CompilerParams(
            dimension_semantics=("parallel", "arbitrary"),
            vmem_limit_bytes=vmem,
        ),
    )(sched, nnz, a, h, h, w_rel, w_root, b, pool, lw)
    return partials.sum(axis=0)


# ---------------------------------------------------------------------------
# Host-side preprocessing
# ---------------------------------------------------------------------------
def precompute_graph(edge_index, edge_weight, batch, num_nodes, num_graphs):
    """Graph-dependent preprocessing.  Cache/reuse this across forwards when
    the graph is static (the O(N^2) scatter + cast dominates otherwise)."""
    n_pad, tm, tk, vmem_cap = _select_tiles(num_nodes)

    # Dense weighted adjacency (dst, src) built directly at the tile-rounded
    # size; duplicate edges sum (PyG scatter-add) in f32 before the bf16 cast.
    src, dst = edge_index[0], edge_index[1]
    a = (jnp.zeros((n_pad, n_pad), jnp.float32)
         .at[dst, src].add(edge_weight).astype(jnp.bfloat16))

    # global_mean_pool as a (G_pad, N_pad) f32 matrix (padded cols are zero).
    g_p = _round_up(num_graphs, 8)
    one_hot = (batch[None, :] == jnp.arange(g_p)[:, None]).astype(jnp.float32)
    counts = jnp.maximum(one_hot.sum(axis=1, keepdims=True), 1.0)
    pool = _pad2(one_hot / counts, g_p, n_pad)

    sched, nnz = _block_schedule(edge_index, n_pad, tm, tk)
    return dict(a=a, pool=pool, sched=sched, nnz=nnz, n_pad=n_pad,
                tm=tm, tk=tk, vmem_cap=vmem_cap, g_p=g_p)


def _fold_bn(w_rel_t, w_root_t, b, gamma, beta, mean, var):
    # BN(y) = y*s + (beta - m*s) with s = gamma * rsqrt(var + eps)
    s = gamma * jax.lax.rsqrt(var + _BN_EPS)
    return w_rel_t * s, w_root_t * s, (b - mean) * s + beta


def fold_params(params):
    """Fold eval-mode BatchNorm into conv weights, pad to lane width, cast."""
    cin, hid = params["w1_rel_t"].shape
    cout = params["lin_w_t"].shape[1]
    cin_p, hid_p, cout_p = (_round_up(c, LANE) for c in (cin, hid, cout))

    def prep(wr, ws, b, rows, cols):
        return (_pad2(wr, rows, cols).astype(jnp.bfloat16),
                _pad2(ws, rows, cols).astype(jnp.bfloat16),
                _pad2(b, 1, cols))

    w1r, w1s, b1 = _fold_bn(params["w1_rel_t"], params["w1_root_t"], params["b1"],
                            params["g1"], params["be1"], params["m1"], params["v1"])
    w2r, w2s, b2 = _fold_bn(params["w2_rel_t"], params["w2_root_t"], params["b2"],
                            params["g2"], params["be2"], params["m2"], params["v2"])
    return dict(
        l1=prep(w1r, w1s, b1, cin_p, hid_p),
        l2=prep(w2r, w2s, b2, hid_p, hid_p),
        l3=prep(params["w3_rel_t"], params["w3_root_t"], params["b3"], hid_p, hid_p),
        lw=_pad2(params["lin_w_t"], hid_p, cout_p),
        lb=_pad2(params["lin_b"], 1, cout_p),
        cin_p=cin_p, hid_p=hid_p, cout_p=cout_p, cout=cout)


def gcn_forward_prepared(x, graph, weights, num_graphs):
    x_p = _pad2(x, graph["n_pad"], weights["cin_p"]).astype(jnp.bfloat16)
    tm, tk, vmem_cap = graph["tm"], graph["tk"], graph["vmem_cap"]
    sched, nnz, a = graph["sched"], graph["nnz"], graph["a"]

    h = _graph_conv_layer(sched, nnz, a, x_p, *weights["l1"], apply_relu=True,
                          out_dtype=jnp.bfloat16, tm=tm, tk=tk, vmem_cap=vmem_cap)
    h = _graph_conv_layer(sched, nnz, a, h, *weights["l2"], apply_relu=True,
                          out_dtype=jnp.bfloat16, tm=tm, tk=tk, vmem_cap=vmem_cap)
    # Layer 3 + global_mean_pool + Linear fused; eval-mode dropout is identity.
    pooled = _graph_conv_pool_layer(sched, nnz, a, h, *weights["l3"],
                                    graph["pool"], weights["lw"],
                                    tm=tm, tk=tk, vmem_cap=vmem_cap)
    out = pooled + weights["lb"]
    return out[:num_graphs, :weights["cout"]]


def gcn_forward(x, edge_index, edge_weight, batch, params, num_graphs):
    graph = precompute_graph(edge_index, edge_weight, batch, x.shape[0], num_graphs)
    weights = fold_params(params)
    return gcn_forward_prepared(x, graph, weights, num_graphs)


# ---------------------------------------------------------------------------
# References
# ---------------------------------------------------------------------------
def gcn_reference_exact(x, edge_index, edge_weight, batch, params, num_graphs):
    """Pure-f32 reference mirroring the PyTorch module (eval mode)."""
    n = x.shape[0]
    src, dst = edge_index[0], edge_index[1]
    a = jnp.zeros((n, n), jnp.float32).at[dst, src].add(edge_weight)
    one_hot = (batch[None, :] == jnp.arange(num_graphs)[:, None]).astype(jnp.float32)
    pool = one_hot / jnp.maximum(one_hot.sum(axis=1, keepdims=True), 1.0)

    def conv(h, wr, ws, b):
        return (a @ h) @ wr + b + h @ ws

    def bn(h, g, be, m, v):
        return (h - m) * jax.lax.rsqrt(v + _BN_EPS) * g + be

    h = jnp.maximum(bn(conv(x, params["w1_rel_t"], params["w1_root_t"], params["b1"]),
                       params["g1"], params["be1"], params["m1"], params["v1"]), 0.0)
    h = jnp.maximum(bn(conv(h, params["w2_rel_t"], params["w2_root_t"], params["b2"]),
                       params["g2"], params["be2"], params["m2"], params["v2"]), 0.0)
    h = conv(h, params["w3_rel_t"], params["w3_root_t"], params["b3"])
    return (pool @ h) @ params["lin_w_t"] + params["lin_b"]


def gcn_reference_quant(x, edge_index, edge_weight, batch, params, num_graphs):
    """Plain-JAX mirror of the kernel's folded-BN / bf16 compute path."""
    graph = precompute_graph(edge_index, edge_weight, batch, x.shape[0], num_graphs)
    weights = fold_params(params)
    a, pool = graph["a"], graph["pool"]
    x_p = _pad2(x, graph["n_pad"], weights["cin_p"]).astype(jnp.bfloat16)

    def conv(h, wr, ws, b):
        agg = jnp.dot(a, h, preferred_element_type=jnp.float32)
        y = jnp.dot(agg.astype(jnp.bfloat16), wr, preferred_element_type=jnp.float32)
        return y + jnp.dot(h, ws, preferred_element_type=jnp.float32) + b

    h = jnp.maximum(conv(x_p, *weights["l1"]), 0.0).astype(jnp.bfloat16)
    h = jnp.maximum(conv(h, *weights["l2"]), 0.0).astype(jnp.bfloat16)
    y3 = conv(h, *weights["l3"])                                   # f32
    pooled = jnp.dot(pool, y3, preferred_element_type=jnp.float32)
    out = jnp.dot(pooled, weights["lw"],
                  preferred_element_type=jnp.float32) + weights["lb"]
    return out[:num_graphs, :weights["cout"]]


# ---------------------------------------------------------------------------
# Parameter init (eval-mode BN stats included)
# ---------------------------------------------------------------------------
def init_params(key, cin, hidden, cout):
    ks = jax.random.split(key, 19)

    def lin_t(k, fin, fout):
        # Linear weight stored pre-transposed as (in, out) so kernels do h @ W^T.
        return jax.random.normal(k, (fin, fout), jnp.float32) / jnp.sqrt(float(fin))

    p = {}
    p["w1_rel_t"], p["w1_root_t"] = lin_t(ks[0], cin, hidden), lin_t(ks[1], cin, hidden)
    p["b1"] = 0.1 * jax.random.normal(ks[2], (1, hidden), jnp.float32)
    p["w2_rel_t"], p["w2_root_t"] = lin_t(ks[3], hidden, hidden), lin_t(ks[4], hidden, hidden)
    p["b2"] = 0.1 * jax.random.normal(ks[5], (1, hidden), jnp.float32)
    p["w3_rel_t"], p["w3_root_t"] = lin_t(ks[6], hidden, hidden), lin_t(ks[7], hidden, hidden)
    p["b3"] = 0.1 * jax.random.normal(ks[8], (1, hidden), jnp.float32)
    p["g1"] = 1.0 + 0.1 * jax.random.normal(ks[9], (1, hidden), jnp.float32)
    p["be1"] = 0.1 * jax.random.normal(ks[10], (1, hidden), jnp.float32)
    p["m1"] = 0.05 * jax.random.normal(ks[11], (1, hidden), jnp.float32)
    p["v1"] = 0.5 + jnp.abs(jax.random.normal(ks[12], (1, hidden), jnp.float32))
    p["g2"] = 1.0 + 0.1 * jax.random.normal(ks[13], (1, hidden), jnp.float32)
    p["be2"] = 0.1 * jax.random.normal(ks[14], (1, hidden), jnp.float32)
    p["m2"] = 0.05 * jax.random.normal(ks[15], (1, hidden), jnp.float32)
    p["v2"] = 0.5 + jnp.abs(jax.random.normal(ks[16], (1, hidden), jnp.float32))
    p["lin_w_t"] = lin_t(ks[17], hidden, cout)
    p["lin_b"] = 0.1 * jax.random.normal(ks[18], (1, cout), jnp.float32)
    return p


if __name__ == "__main__":
    key = jax.random.PRNGKey(0)
    k_x, k_w, k_p = jax.random.split(key, 3)

    N, CIN, HID, COUT, G = 16, 4, 32, 2, 2
    NPG = N // G

    x = jax.random.normal(k_x, (N, CIN), jnp.float32)
    batch = jnp.repeat(jnp.arange(G, dtype=jnp.int32), NPG)

    # Bidirectional ring within each graph.
    src, dst = [], []
    for g in range(G):
        base = g * NPG
        for i in range(NPG):
            j = (i + 1) % NPG
            src += [base + i, base + j]
            dst += [base + j, base + i]
    edge_index = jnp.array([src, dst], jnp.int32)              # (2, E)
    edge_weight = jax.random.uniform(k_w, (edge_index.shape[1],),
                                     jnp.float32, 0.1, 1.0)     # (E,)

    params = init_params(k_p, CIN, HID, COUT)

    out = jax.block_until_ready(
        gcn_forward(x, edge_index, edge_weight, batch, params, G))
    assert out.shape == (G, COUT), out.shape

    # Tight check vs a plain-JAX mirror of the exact kernel compute path.
    ref_q = gcn_reference_quant(x, edge_index, edge_weight, batch, params, G)
    assert jnp.allclose(out, ref_q, atol=2e-3, rtol=2e-3), (out, ref_q)

    # Looser check vs the PyTorch-faithful f32 reference (bf16 MXU tolerance).
    ref_f32 = gcn_reference_exact(x, edge_index, edge_weight, batch, params, G)
    assert jnp.allclose(out, ref_f32, atol=5e-2, rtol=5e-2), (out, ref_f32)

    print("KERNEL_OK")
</pallas_src>

<mosaic_0001>
module attributes {stable_mosaic.version = 11 : i64} {
  func.func @_graph_conv_kernel(%arg0: i32, %arg1: i32, %arg2: memref<1x1xi32, #tpu.memory_space<smem>>, %arg3: memref<1xi32, #tpu.memory_space<smem>>, %arg4: memref<128x128xbf16, #tpu.memory_space<vmem>>, %arg5: memref<128x128xbf16, #tpu.memory_space<vmem>>, %arg6: memref<128x128xbf16, #tpu.memory_space<vmem>>, %arg7: memref<128x128xbf16, #tpu.memory_space<vmem>>, %arg8: memref<128x128xbf16, #tpu.memory_space<vmem>>, %arg9: memref<1x128xf32, #tpu.memory_space<vmem>>, %arg10: memref<128x128xbf16, #tpu.memory_space<vmem>>, %arg11: memref<128x128xf32, #tpu.memory_space<vmem>>) attributes {dimension_semantics = [#tpu.dimension_semantics<parallel>, #tpu.dimension_semantics<arbitrary>], iteration_bounds = array<i64: 1, 1>, scalar_prefetch = 2 : i64, scratch_operands = 1 : i64, tpu.core_type = #tpu.core_type<tc>, window_params = [{transform_indices = @transform_0, window_bounds = array<i64: 128, 128>}, {transform_indices = @transform_1, window_bounds = array<i64: 128, 128>}, {transform_indices = @transform_2, window_bounds = array<i64: 128, 128>}, {pipeline_mode = #tpu.pipeline_mode<synchronous>, transform_indices = @transform_3, window_bounds = array<i64: 128, 128>}, {pipeline_mode = #tpu.pipeline_mode<synchronous>, transform_indices = @transform_4, window_bounds = array<i64: 128, 128>}, {pipeline_mode = #tpu.pipeline_mode<synchronous>, transform_indices = @transform_5, window_bounds = array<i64: 1, 128>}, {transform_indices = @transform_6, window_bounds = array<i64: 128, 128>}]} {
    %c0_i32 = arith.constant 0 : i32
    %0 = arith.cmpi eq, %arg1, %c0_i32 : i32
    %1 = arith.extui %0 : i1 to i32
    %c0_i32_0 = arith.constant 0 : i32
    %2 = arith.cmpi ne, %1, %c0_i32_0 : i32
    scf.if %2 {
      %cst = arith.constant 0.000000e+00 : f32
      %11 = vector.broadcast %cst : f32 to vector<128x128xf32>
      %c0 = arith.constant 0 : index
      %c0_4 = arith.constant 0 : index
      %12 = vector.load %arg11[%c0, %c0_4] : memref<128x128xf32, #tpu.memory_space<vmem>>, vector<128x128xf32>
      tpu.vector_store %arg11[%c0, %c0_4], %11 {strides = array<i32>} : memref<128x128xf32, #tpu.memory_space<vmem>>, vector<128x128xf32>,
    } else {
    }
    %3 = arith.index_cast %arg0 : i32 to index
    %4 = memref.load %arg3[%3] : memref<1xi32, #tpu.memory_space<smem>>
    %5 = arith.cmpi slt, %arg1, %4 : i32
    %6 = arith.extui %5 : i1 to i32
    %c0_i32_1 = arith.constant 0 : i32
    %7 = arith.cmpi ne, %6, %c0_i32_1 : i32
    scf.if %7 {
      %c0 = arith.constant 0 : index
      %c0_4 = arith.constant 0 : index
      %11 = vector.load %arg11[%c0, %c0_4] : memref<128x128xf32, #tpu.memory_space<vmem>>, vector<128x128xf32>
      %c0_5 = arith.constant 0 : index
      %c0_6 = arith.constant 0 : index
      %12 = vector.load %arg4[%c0_5, %c0_6] : memref<128x128xbf16, #tpu.memory_space<vmem>>, vector<128x128xbf16>
      %c0_7 = arith.constant 0 : index
      %c0_8 = arith.constant 0 : index
      %13 = vector.load %arg5[%c0_7, %c0_8] : memref<128x128xbf16, #tpu.memory_space<vmem>>, vector<128x128xbf16>
      %cst = arith.constant dense<0.000000e+00> : vector<128x128xf32>
      %14 = tpu.matmul %12, %13, %cst {dimension_numbers = #tpu.dot_dimension_numbers<[1], [0], [0], [1], [0, 0, 1, 1], [], []>} : vector<128x128xbf16>, vector<128x128xbf16>, vector<128x128xf32> -> vector<128x128xf32>
      %15 = arith.addf %11, %14 : vector<128x128xf32>
      %c0_9 = arith.constant 0 : index
      %c0_10 = arith.constant 0 : index
      %16 = vector.load %arg11[%c0_9, %c0_10] : memref<128x128xf32, #tpu.memory_space<vmem>>, vector<128x128xf32>
      tpu.vector_store %arg11[%c0_9, %c0_10], %15 {strides = array<i32>} : memref<128x128xf32, #tpu.memory_space<vmem>>, vector<128x128xf32>,
    } else {
    }
    %c0_i32_2 = arith.constant 0 : i32
    %8 = arith.cmpi eq, %arg1, %c0_i32_2 : i32
    %9 = arith.extui %8 : i1 to i32
    %c0_i32_3 = arith.constant 0 : i32
    %10 = arith.cmpi ne, %9, %c0_i32_3 : i32
    scf.if %10 {
      %c0 = arith.constant 0 : index
      %c0_4 = arith.constant 0 : index
      %11 = vector.load %arg11[%c0, %c0_4] : memref<128x128xf32, #tpu.memory_space<vmem>>, vector<128x128xf32>
      %12 = arith.truncf %11 : vector<128x128xf32> to vector<128x128xbf16>
      %c0_5 = arith.constant 0 : index
      %c0_6 = arith.constant 0 : index
      %13 = vector.load %arg7[%c0_5, %c0_6] : memref<128x128xbf16, #tpu.memory_space<vmem>>, vector<128x128xbf16>
      %cst = arith.constant dense<0.000000e+00> : vector<128x128xf32>
      %14 = tpu.matmul %12, %13, %cst {dimension_numbers = #tpu.dot_dimension_numbers<[1], [0], [0], [1], [0, 0, 1, 1], [], []>} : vector<128x128xbf16>, vector<128x128xbf16>, vector<128x128xf32> -> vector<128x128xf32>
      %c0_7 = arith.constant 0 : index
      %c0_8 = arith.constant 0 : index
      %15 = vector.load %arg6[%c0_7, %c0_8] : memref<128x128xbf16, #tpu.memory_space<vmem>>, vector<128x128xbf16>
      %c0_9 = arith.constant 0 : index
      %c0_10 = arith.constant 0 : index
      %16 = vector.load %arg8[%c0_9, %c0_10] : memref<128x128xbf16, #tpu.memory_space<vmem>>, vector<128x128xbf16>
      %cst_11 = arith.constant dense<0.000000e+00> : vector<128x128xf32>
      %17 = tpu.matmul %15, %16, %cst_11 {dimension_numbers = #tpu.dot_dimension_numbers<[1], [0], [0], [1], [0, 0, 1, 1], [], []>} : vector<128x128xbf16>, vector<128x128xbf16>, vector<128x128xf32> -> vector<128x128xf32>
      %18 = arith.addf %14, %17 : vector<128x128xf32>
      %c0_12 = arith.constant 0 : index
      %c0_13 = arith.constant 0 : index
      %19 = vector.load %arg9[%c0_12, %c0_13] : memref<1x128xf32, #tpu.memory_space<vmem>>, vector<1x128xf32>
      %20 = vector.broadcast %19 : vector<1x128xf32> to vector<128x128xf32>
      %21 = arith.addf %18, %20 : vector<128x128xf32>
      %cst_14 = arith.constant 0.000000e+00 : f32
      %22 = vector.broadcast %cst_14 : f32 to vector<128x128xf32>
      %23 = arith.maximumf %21, %22 : vector<128x128xf32>
      %24 = arith.truncf %23 : vector<128x128xf32> to vector<128x128xbf16>
      %c0_15 = arith.constant 0 : index
      %c0_16 = arith.constant 0 : index
      %25 = vector.load %arg10[%c0_15, %c0_16] : memref<128x128xbf16, #tpu.memory_space<vmem>>, vector<128x128xbf16>
      tpu.vector_store %arg10[%c0_15, %c0_16], %24 {strides = array<i32>} : memref<128x128xbf16, #tpu.memory_space<vmem>>, vector<128x128xbf16>,
    } else {
    }
    return
  }
  func.func @transform_0(%arg0: i32, %arg1: i32, %arg2: memref<1x1xi32, #tpu.memory_space<smem>>, %arg3: memref<1xi32, #tpu.memory_space<smem>>) -> (i32, i32) {
    %0 = arith.index_cast %arg0 : i32 to index
    %1 = arith.index_cast %arg1 : i32 to index
    %2 = memref.load %arg2[%0, %1] : memref<1x1xi32, #tpu.memory_space<smem>>
    %c0_i32 = arith.constant 0 : i32
    return %arg0, %2 : i32, i32
  }
  func.func @transform_1(%arg0: i32, %arg1: i32, %arg2: memref<1x1xi32, #tpu.memory_space<smem>>, %arg3: memref<1xi32, #tpu.memory_space<smem>>) -> (i32, i32) {
    %0 = arith.index_cast %arg0 : i32 to index
    %1 = arith.index_cast %arg1 : i32 to index
    %2 = memref.load %arg2[%0, %1] : memref<1x1xi32, #tpu.memory_space<smem>>
    %c0_i32 = arith.constant 0 : i32
    %c0_i32_0 = arith.constant 0 : i32
    return %2, %c0_i32 : i32, i32
  }
  func.func @transform_2(%arg0: i32, %arg1: i32, %arg2: memref<1x1xi32, #tpu.memory_space<smem>>, %arg3: memref<1xi32, #tpu.memory_space<smem>>) -> (i32, i32) {
    %c0_i32 = arith.constant 0 : i32
    %c0_i32_0 = arith.constant 0 : i32
    return %arg0, %c0_i32 : i32, i32
  }
  func.func @transform_3(%arg0: i32, %arg1: i32, %arg2: memref<1x1xi32, #tpu.memory_space<smem>>, %arg3: memref<1xi32, #tpu.memory_space<smem>>) -> (i32, i32) {
    %c0_i32 = arith.constant 0 : i32
    %c0_i32_0 = arith.constant 0 : i32
    %c0_i32_1 = arith.constant 0 : i32
    return %c0_i32, %c0_i32_0 : i32, i32
  }
  func.func @transform_4(%arg0: i32, %arg1: i32, %arg2: memref<1x1xi32, #tpu.memory_space<smem>>, %arg3: memref<1xi32, #tpu.memory_space<smem>>) -> (i32, i32) {
    %c0_i32 = arith.constant 0 : i32
    %c0_i32_0 = arith.constant 0 : i32
    %c0_i32_1 = arith.constant 0 : i32
    return %c0_i32, %c0_i32_0 : i32, i32
  }
  func.func @transform_5(%arg0: i32, %arg1: i32, %arg2: memref<1x1xi32, #tpu.memory_space<smem>>, %arg3: memref<1xi32, #tpu.memory_space<smem>>) -> (i32, i32) {
    %c0_i32 = arith.constant 0 : i32
    %c0_i32_0 = arith.constant 0 : i32
    %c0_i32_1 = arith.constant 0 : i32
    return %c0_i32, %c0_i32_0 : i32, i32
  }
  func.func @transform_6(%arg0: i32, %arg1: i32, %arg2: memref<1x1xi32, #tpu.memory_space<smem>>, %arg3: memref<1xi32, #tpu.memory_space<smem>>) -> (i32, i32) {
    %c0_i32 = arith.constant 0 : i32
    %c0_i32_0 = arith.constant 0 : i32
    return %arg0, %c0_i32 : i32, i32
  }
}

</mosaic_0001>

<llo_original>
// kernel: tpu_custom_call.1
$region0: #{tpu_custom_call.1}
  #allocation0 [shape = 'u32[]', space=smem, size = 0x4, offset = 0x4, fixed_abs, tag = 'smem constant byte address 0x4 - core index']
  #allocation1 [shape = 'u32[144,128]{1,0:T(1,128)}', space=vmem, size = 0x12000, scoped, tag = 'internal scratch']
  #allocation2 [shape = 'f32[128,128]{1,0:T(8,128)}', space=vmem, size = 0x10000, scoped, tag = 'scratch operand']
  #allocation3 [shape = 's32[1]{0}', space=sflag, size = 0x4, scoped, tag = 'scoped memory for tpu_custom_call.1']
  #allocation4 [shape = 's32[1,1]{1,0:T(1,128)S(6)}', space=smem, size = 0x200, scoped, tag = 'prefetched SMEM operand 0']
  #allocation5 [shape = 's32[1]{0:T(128)S(6)}', space=smem, size = 0x200, scoped, tag = 'prefetched SMEM operand 1']
  %s0 = inlined_call_operand.<no memory space> [shape: s32[1,1], index: 0, kind: input, shape index: {}]
  %s1 = inlined_call_operand.<no memory space> [shape: s32[1], index: 1, kind: input, shape index: {}]
  %s2 = inlined_call_operand.hbm [shape: bf16[128,128], index: 2, kind: input, shape index: {}]
  %s3 = inlined_call_operand.hbm [shape: bf16[128,128], index: 3, kind: input, shape index: {}]
  %s4 = inlined_call_operand.hbm [shape: bf16[128,128], index: 4, kind: input, shape index: {}]
  %s5 = inlined_call_operand.hbm [shape: bf16[128,128], index: 5, kind: input, shape index: {}]
  %s6 = inlined_call_operand.hbm [shape: bf16[128,128], index: 6, kind: input, shape index: {}]
  %s7 = inlined_call_operand.vmem [shape: f32[1,128], index: 7, kind: input, shape index: {}]
  %s8 = inlined_call_operand.hbm [shape: bf16[128,128], index: 8, kind: output, shape index: {}]
  %s9 = sld [smem:[#allocation0]]
  $region66: #{tpu_custom_call.1} parent=0
    _
  %s11 = ssub.s32 1, %s9
  %s12 = scalar_select 0, %s11, %s9
  %13 = sst [smem:[#allocation4]] %s0
  %14 = sst [smem:[#allocation5]] %s1
  $region1: #{tpu_custom_call.1} parent=0
    #allocation6 [shape = 'u8[32768]{0}', space=vmem, size = 0x8000, scoped, tag = 'input window, operand 2, single buffered']
    #allocation7 [shape = 's32[1]{0}', space=sflag, size = 0x4, scoped, tag = 'scoped memory for tpu_custom_call.1']
    #allocation8 [shape = 's32[1]{0}', space=sflag, size = 0x4, scoped, tag = 'scoped memory for tpu_custom_call.1']
    #allocation9 [shape = 'u8[32768]{0}', space=vmem, size = 0x8000, scoped, tag = 'input window, operand 3, single buffered']
    #allocation10 [shape = 's32[1]{0}', space=sflag, size = 0x4, scoped, tag = 'scoped memory for tpu_custom_call.1']
    #allocation11 [shape = 'u8[32768]{0}', space=vmem, size = 0x8000, scoped, tag = 'input window, operand 4, single buffered']
    #allocation12 [shape = 'u8[32768]{0}', space=vmem, size = 0x8000, scoped, tag = 'input window, operand 5, single buffered']
    #allocation13 [shape = 's32[1]{0}', space=sflag, size = 0x4, scoped, tag = 'scoped memory for tpu_custom_call.1']
    #allocation14 [shape = 'u8[32768]{0}', space=vmem, size = 0x8000, scoped, tag = 'input window, operand 6, single buffered']
    #allocation15 [shape = 'u8[32768]{0}', space=vmem, size = 0x8000, scoped, tag = 'output window, operand 0, single buffered']
    %15 = vsyncpa [#allocation7], 0
    %16 = vsyncpa [#allocation10], 0
    %17 = vsyncpa [#allocation13], 0
    %18 = vsyncpa [#allocation8], 0
    // Predicated region
    $region2: #{tpu_custom_call.1} parent=1 // pred_check
      _
    $region3: #{tpu_custom_call.1} parent=1 // pred_check_branch
      %20 = sbr.rel (0) target = $region5
    $region4: #{tpu_custom_call.1} parent=1 // pred_region
      %s21 = sadd.s32 0, 0
      %s22 = smul.u32 %s21, 128
      %s23 = sadd.s32 %s22, 0
      %s24 = sld [smem:[#allocation4 + %s23]]
      %s26 = ssub.s32 1024, 1024
      %27 = vsyncadd [#allocation7], %s26
      %s28 = smul.addr %s24, 64
      %s29 = scalar_lea.hbm %s2, %s28
      %s30 = sshll.u32 [#allocation6], 4
      %s31 = int_to_ptr.vmem [resolvable:$true] %s30
      %36 = dma.hbm_to_vmem [thread:$0]  %s29, 1024, %s31, [#allocation7], 64, 64, 4
    $region5: #{tpu_custom_call.1} parent=1 // pred_fallthru
      _
    // Predicated region
    $region6: #{tpu_custom_call.1} parent=1 // pred_check
      _
    $region7: #{tpu_custom_call.1} parent=1 // pred_check_branch
      %38 = sbr.rel (0) target = $region9
    $region8: #{tpu_custom_call.1} parent=1 // pred_region
      %s39 = sadd.s32 0, 0
      %s40 = smul.u32 %s39, 128
      %s41 = sadd.s32 %s40, 0
      %s42 = sld [smem:[#allocation4 + %s41]]
      %s43 = smul.u32 16, %s42
      %s45 = ssub.s32 1024, 1024
      %46 = vsyncadd [#allocation10], %s45
      %s47 = smul.addr %s43, 64
      %s48 = scalar_lea.hbm %s3, %s47
      %s49 = sshll.u32 [#allocation9], 4
      %s50 = int_to_ptr.vmem [resolvable:$true] %s49
      %55 = dma.hbm_to_vmem [thread:$0]  %s48, 1024, %s50, [#allocation10], 64, 64, 4
    $region9: #{tpu_custom_call.1} parent=1 // pred_fallthru
      _
    // Predicated region
    $region10: #{tpu_custom_call.1} parent=1 // pred_check
      _
    $region11: #{tpu_custom_call.1} parent=1 // pred_check_branch
      %57 = sbr.rel (0) target = $region13
    $region12: #{tpu_custom_call.1} parent=1 // pred_region
      %s59 = ssub.s32 1024, 1024
      %60 = vsyncadd [#allocation10], %s59
      %s61 = sshll.u32 [#allocation11], 4
      %s62 = int_to_ptr.vmem [resolvable:$true] %s61
      %67 = dma.hbm_to_vmem [thread:$0]  %s4, 1024, %s62, [#allocation10], 64, 64, 4
    $region13: #{tpu_custom_call.1} parent=1 // pred_fallthru
      _
    // Predicated region
    $region14: #{tpu_custom_call.1} parent=1 // pred_check
      _
    $region15: #{tpu_custom_call.1} parent=1 // pred_check_branch
      %69 = sbr.rel (0) target = $region17
    $region16: #{tpu_custom_call.1} parent=1 // pred_region
      %s71 = ssub.s32 1024, 1024
      %72 = vsyncadd [#allocation13], %s71
      %s73 = sshll.u32 [#allocation12], 4
      %s74 = int_to_ptr.vmem [resolvable:$true] %s73
      %79 = dma.hbm_to_vmem [thread:$0]  %s5, 1024, %s74, [#allocation13], 64, 64, 4
    $region17: #{tpu_custom_call.1} parent=1 // pred_fallthru
      _
    // Predicated region
    $region18: #{tpu_custom_call.1} parent=1 // pred_check
      _
    $region19: #{tpu_custom_call.1} parent=1 // pred_check_branch
      %81 = sbr.rel (0) target = $region21
    $region20: #{tpu_custom_call.1} parent=1 // pred_region
      %s83 = ssub.s32 1024, 1024
      %84 = vsyncadd [#allocation13], %s83
      %s85 = sshll.u32 [#allocation14], 4
      %s86 = int_to_ptr.vmem [resolvable:$true] %s85
      %91 = dma.hbm_to_vmem [thread:$0]  %s6, 1024, %s86, [#allocation13], 64, 64, 4
    $region21: #{tpu_custom_call.1} parent=1 // pred_fallthru
      _
    // Predicated region
    $region22: #{tpu_custom_call.1} parent=1 // pred_check
      _
    $region23: #{tpu_custom_call.1} parent=1 // pred_check_branch
      %93 = sbr.rel (0) target = $region25
    $region24: #{tpu_custom_call.1} parent=1 // pred_region
      _
    $region25: #{tpu_custom_call.1} parent=1 // pred_fallthru
      _
    // Predicated region
    $region26: #{tpu_custom_call.1} parent=1 // pred_check
      _
    $region27: #{tpu_custom_call.1} parent=1 // pred_check_branch
      %95 = sbr.rel (0) target = $region29
    $region28: #{tpu_custom_call.1} parent=1 // pred_region
      %96 = dma.done [#allocation7], 1024
    $region29: #{tpu_custom_call.1} parent=1 // pred_fallthru
      _
    // Predicated region
    $region30: #{tpu_custom_call.1} parent=1 // pred_check
      _
    $region31: #{tpu_custom_call.1} parent=1 // pred_check_branch
      %98 = sbr.rel (0) target = $region33
    $region32: #{tpu_custom_call.1} parent=1 // pred_region
      %99 = dma.done [#allocation10], 1024
    $region33: #{tpu_custom_call.1} parent=1 // pred_fallthru
      _
    // Predicated region
    $region34: #{tpu_custom_call.1} parent=1 // pred_check
      _
    $region35: #{tpu_custom_call.1} parent=1 // pred_check_branch
      %101 = sbr.rel (0) target = $region37
    $region36: #{tpu_custom_call.1} parent=1 // pred_region
      %102 = dma.done [#allocation10], 1024
    $region37: #{tpu_custom_call.1} parent=1 // pred_fallthru
      _
    // Predicated region
    $region38: #{tpu_custom_call.1} parent=1 // pred_check
      _
    $region39: #{tpu_custom_call.1} parent=1 // pred_check_branch
      %104 = sbr.rel (0) target = $region41
    $region40: #{tpu_custom_call.1} parent=1 // pred_region
      %105 = dma.done [#allocation13], 1024
    $region41: #{tpu_custom_call.1} parent=1 // pred_fallthru
      _
    // Predicated region
    $region42: #{tpu_custom_call.1} parent=1 // pred_check
      _
    $region43: #{tpu_custom_call.1} parent=1 // pred_check_branch
      %107 = sbr.rel (0) target = $region45
    $region44: #{tpu_custom_call.1} parent=1 // pred_region
      %108 = dma.done [#allocation13], 1024
    $region45: #{tpu_custom_call.1} parent=1 // pred_fallthru
      _
    %s109 = sadd.s32 0, 0
    %s110 = smul.u32 %s109, 128
    %s111 = sadd.s32 %s110, 0
    %s112 = sld [smem:[#allocation4 + %s111]]
    %s113 = sadd.s32 0, 0
    %s114 = smul.u32 %s113, 128
    %s115 = sadd.s32 %s114, 0
    %s116 = sld [smem:[#allocation4 + %s115]]
    %s117 = smul.u32 16, %s116
    %p119 = scmp.eq.s32.totalorder 0, 0
    // Predicated region
    $region46: #{tpu_custom_call.1} parent=1 // pred_check
      %p120 = pneg %p119
    $region47: #{tpu_custom_call.1} parent=1 // pred_check_branch
      %122 = sbr.rel (%p120) target = $region49
    $region48: #{tpu_custom_call.1} parent=1 // pred_region
      %123 = vst [vmem:[#allocation2] sm:$0xff] 0.0
      %124 = vst [vmem:[#allocation2 + $0x8] sm:$0xff] 0.0
      %125 = vst [vmem:[#allocation2 + $0x10] sm:$0xff] 0.0
      %126 = vst [vmem:[#allocation2 + $0x18] sm:$0xff] 0.0
      %127 = vst [vmem:[#allocation2 + $0x20] sm:$0xff] 0.0
      %128 = vst [vmem:[#allocation2 + $0x28] sm:$0xff] 0.0
      %129 = vst [vmem:[#allocation2 + $0x30] sm:$0xff] 0.0
      %130 = vst [vmem:[#allocation2 + $0x38] sm:$0xff] 0.0
      %131 = vst [vmem:[#allocation2 + $0x40] sm:$0xff] 0.0
      %132 = vst [vmem:[#allocation2 + $0x48] sm:$0xff] 0.0
      %133 = vst [vmem:[#allocation2 + $0x50] sm:$0xff] 0.0
      %134 = vst [vmem:[#allocation2 + $0x58] sm:$0xff] 0.0
      %135 = vst [vmem:[#allocation2 + $0x60] sm:$0xff] 0.0
      %136 = vst [vmem:[#allocation2 + $0x68] sm:$0xff] 0.0
      %137 = vst [vmem:[#allocation2 + $0x70] sm:$0xff] 0.0
      %138 = vst [vmem:[#allocation2 + $0x78] sm:$0xff] 0.0
    $region49: #{tpu_custom_call.1} parent=1 // pred_fallthru
      _
    %s139 = sld [smem:[#allocation5]]
    %p140 = scmp.lt.s32.totalorder 0, %s139
    // Predicated region
    $region50: #{tpu_custom_call.1} parent=1 // pred_check
      %p141 = pneg %p140
    $region51: #{tpu_custom_call.1} parent=1 // pred_check_branch
      %143 = sbr.rel (%p141) target = $region53
    $region52: #{tpu_custom_call.1} parent=1 // pred_region
      %v144 = vld [vmem:[#allocation2] sm:$0xff]
      %v145 = vld [vmem:[#allocation2 + $0x8] sm:$0xff]
      %v146 = vld [vmem:[#allocation2 + $0x10] sm:$0xff]
      %v147 = vld [vmem:[#allocation2 + $0x18] sm:$0xff]
      %v148 = vld [vmem:[#allocation2 + $0x20] sm:$0xff]
      %v149 = vld [vmem:[#allocation2 + $0x28] sm:$0xff]
      %v150 = vld [vmem:[#allocation2 + $0x30] sm:$0xff]
      %v151 = vld [vmem:[#allocation2 + $0x38] sm:$0xff]
      %v152 = vld [vmem:[#allocation2 + $0x40] sm:$0xff]
      %v153 = vld [vmem:[#allocation2 + $0x48] sm:$0xff]
      %v154 = vld [vmem:[#allocation2 + $0x50] sm:$0xff]
      %v155 = vld [vmem:[#allocation2 + $0x58] sm:$0xff]
      %v156 = vld [vmem:[#allocation2 + $0x60] sm:$0xff]
      %v157 = vld [vmem:[#allocation2 + $0x68] sm:$0xff]
      %v158 = vld [vmem:[#allocation2 + $0x70] sm:$0xff]
      %v159 = vld [vmem:[#allocation2 + $0x78] sm:$0xff]
      %v160 = vld [vmem:[#allocation6] sm:$0xf]
      %v161 = vld [vmem:[#allocation6 + $0x4] sm:$0xf]
      %v162 = vld [vmem:[#allocation6 + $0x8] sm:$0xf]
      %v163 = vld [vmem:[#allocation6 + $0xc] sm:$0xf]
      %v164 = vld [vmem:[#allocation6 + $0x10] sm:$0xf]
      %v165 = vld [vmem:[#allocation6 + $0x14] sm:$0xf]
      %v166 = vld [vmem:[#allocation6 + $0x18] sm:$0xf]
      %v167 = vld [vmem:[#allocation6 + $0x1c] sm:$0xf]
      %v168 = vld [vmem:[#allocation6 + $0x20] sm:$0xf]
      %v169 = vld [vmem:[#allocation6 + $0x24] sm:$0xf]
      %v170 = vld [vmem:[#allocation6 + $0x28] sm:$0xf]
      %v171 = vld [vmem:[#allocation6 + $0x2c] sm:$0xf]
      %v172 = vld [vmem:[#allocation6 + $0x30] sm:$0xf]
      %v173 = vld [vmem:[#allocation6 + $0x34] sm:$0xf]
      %v174 = vld [vmem:[#allocation6 + $0x38] sm:$0xf]
      %v175 = vld [vmem:[#allocation6 + $0x3c] sm:$0xf]
      %v176 = vld [vmem:[#allocation9] sm:$0xf]
      %v177 = vld [vmem:[#allocation9 + $0x4] sm:$0xf]
      %v178 = vld [vmem:[#allocation9 + $0x8] sm:$0xf]
      %v179 = vld [vmem:[#allocation9 + $0xc] sm:$0xf]
      %v180 = vld [vmem:[#allocation9 + $0x10] sm:$0xf]
      %v181 = vld [vmem:[#allocation9 + $0x14] sm:$0xf]
      %v182 = vld [vmem:[#allocation9 + $0x18] sm:$0xf]
      %v183 = vld [vmem:[#allocation9 + $0x1c] sm:$0xf]
      %v184 = vld [vmem:[#allocation9 + $0x20] sm:$0xf]
      %v185 = vld [vmem:[#allocation9 + $0x24] sm:$0xf]
      %v186 = vld [vmem:[#allocation9 + $0x28] sm:$0xf]
      %v187 = vld [vmem:[#allocation9 + $0x2c] sm:$0xf]
      %v188 = vld [vmem:[#allocation9 + $0x30] sm:$0xf]
      %v189 = vld [vmem:[#allocation9 + $0x34] sm:$0xf]
      %v190 = vld [vmem:[#allocation9 + $0x38] sm:$0xf]
      %v191 = vld [vmem:[#allocation9 + $0x3c] sm:$0xf]
      %v208 = vunpack.c.l.b16 %v160
      %v209 = vunpack.c.l.b16 %v161
      %v210 = vunpack.c.l.b16 %v162
      %v211 = vunpack.c.l.b16 %v163
      %v212 = vunpack.c.l.b16 %v164
      %v213 = vunpack.c.l.b16 %v165
      %v214 = vunpack.c.l.b16 %v166
      %v215 = vunpack.c.l.b16 %v167
      %v216 = vunpack.c.l.b16 %v168
      %v217 = vunpack.c.l.b16 %v169
      %v218 = vunpack.c.l.b16 %v170
      %v219 = vunpack.c.l.b16 %v171
      %v220 = vunpack.c.l.b16 %v172
      %v221 = vunpack.c.l.b16 %v173
      %v222 = vunpack.c.l.b16 %v174
      %v223 = vunpack.c.l.b16 %v175
      %v224 = vpack.c.b16 %v209, %v208
      %v225 = vpack.c.b16 %v211, %v210
      %v226 = vpack.c.b16 %v213, %v212
      %v227 = vpack.c.b16 %v215, %v214
      %v228 = vpack.c.b16 %v217, %v216
      %v229 = vpack.c.b16 %v219, %v218
      %v230 = vpack.c.b16 %v221, %v220
      %v231 = vpack.c.b16 %v223, %v222
      %v256 = vunpack.c.l.b16 %v176
      %v257 = vunpack.c.l.b16 %v177
      %v258 = vunpack.c.l.b16 %v178
      %v259 = vunpack.c.l.b16 %v179
      %v260 = vunpack.c.l.b16 %v180
      %v261 = vunpack.c.l.b16 %v181
      %v262 = vunpack.c.l.b16 %v182
      %v263 = vunpack.c.l.b16 %v183
      %v264 = vunpack.c.l.b16 %v184
      %v265 = vunpack.c.l.b16 %v185
      %v266 = vunpack.c.l.b16 %v186
      %v267 = vunpack.c.l.b16 %v187
      %v268 = vunpack.c.l.b16 %v188
      %v269 = vunpack.c.l.b16 %v189
      %v270 = vunpack.c.l.b16 %v190
      %v271 = vunpack.c.l.b16 %v191
      %v272 = vpack.c.b16 %v257, %v256
      %v273 = vpack.c.b16 %v259, %v258
      %v274 = vpack.c.b16 %v261, %v260
      %v275 = vpack.c.b16 %v263, %v262
      %v276 = vpack.c.b16 %v265, %v264
      %v277 = vpack.c.b16 %v267, %v266
      %v278 = vpack.c.b16 %v269, %v268
      %v279 = vpack.c.b16 %v271, %v270
      %288 = vmatprep.subr.bf16.mxu0 0
      %289 = vmatpush1.bf16.msra.mxu0 %v272
      %290 = vmatprep.subr.bf16.mxu0 0
      %291 = vmatpush1.bf16.msra.mxu0 %v273
      %292 = vmatprep.subr.bf16.mxu0 0
      %293 = vmatpush1.bf16.msra.mxu0 %v274
      %294 = vmatprep.subr.bf16.mxu0 0
      %295 = vmatpush1.bf16.msra.mxu0 %v275
      %296 = vmatprep.subr.bf16.mxu0 0
      %297 = vmatpush1.bf16.msra.mxu0 %v276
      %298 = vmatprep.subr.bf16.mxu0 0
      %299 = vmatpush1.bf16.msra.mxu0 %v277
      %300 = vmatprep.subr.bf16.mxu0 0
      %301 = vmatpush1.bf16.msra.mxu0 %v278
      %302 = vmatprep.subr.bf16.mxu0 0
      %303 = vmatpush1.bf16.msra.mxu0 %v279
      %304 = vmatprep.subr.bf16.mxu0 0
      %305 = vmatpush1.bf16.msra.mxu0 0
      %306 = vmatprep.subr.bf16.mxu0 0
      %307 = vmatpush1.bf16.msra.mxu0 0
      %308 = vmatprep.subr.bf16.mxu0 0
      %309 = vmatpush1.bf16.msra.mxu0 0
      %310 = vmatprep.subr.bf16.mxu0 0
      %311 = vmatpush1.bf16.msra.mxu0 0
      %312 = vmatprep.subr.bf16.mxu0 0
      %313 = vmatpush1.bf16.msra.mxu0 0
      %314 = vmatprep.subr.bf16.mxu0 0
      %315 = vmatpush1.bf16.msra.mxu0 0
      %316 = vmatprep.subr.bf16.mxu0 0
      %317 = vmatpush1.bf16.msra.mxu0 0
      %318 = vmatprep.subr.bf16.mxu0 0
      %319 = vmatpush1.bf16.msra.mxu0 0
      %320 = vmatprep.mubr.bf16.mxu0 0
      %321 = vmatmul.mubr.bf16.gmra.mrb[0].mxu0 %v224
      %v322 = vpop.f32.mrb[0].mxu0
      %v323 = vadd.f32 0.0, %v322
      %v324 = vpop.f32.mrb[0].mxu0
      %v325 = vpop.f32.mrb[0].mxu0
      %v326 = vadd.f32 0.0, %v325
      %v327 = vpop.f32.mrb[0].mxu0
      %328 = vmatprep.mubr.bf16.mxu0 0
      %329 = vmatmul.mubr.bf16.gmra.mrb[0].mxu0 %v225
      %v330 = vpop.f32.mrb[0].mxu0
      %v331 = vadd.f32 0.0, %v330
      %v332 = vpop.f32.mrb[0].mxu0
      %v333 = vpop.f32.mrb[0].mxu0
      %v334 = vadd.f32 0.0, %v333
      %v335 = vpop.f32.mrb[0].mxu0
      %336 = vmatprep.mubr.bf16.mxu0 0
      %337 = vmatmul.mubr.bf16.gmra.mrb[0].mxu0 %v226
      %v338 = vpop.f32.mrb[0].mxu0
      %v339 = vadd.f32 0.0, %v338
      %v340 = vpop.f32.mrb[0].mxu0
      %v341 = vpop.f32.mrb[0].mxu0
      %v342 = vadd.f32 0.0, %v341
      %v343 = vpop.f32.mrb[0].mxu0
      %344 = vmatprep.mubr.bf16.mxu0 0
      %345 = vmatmul.mubr.bf16.gmra.mrb[0].mxu0 %v227
      %v346 = vpop.f32.mrb[0].mxu0
      %v347 = vadd.f32 0.0, %v346
      %v348 = vpop.f32.mrb[0].mxu0
      %v349 = vpop.f32.mrb[0].mxu0
      %v350 = vadd.f32 0.0, %v349
      %v351 = vpop.f32.mrb[0].mxu0
      %352 = vmatprep.mubr.bf16.mxu0 0
      %353 = vmatmul.mubr.bf16.gmra.mrb[0].mxu0 %v228
      %v354 = vpop.f32.mrb[0].mxu0
      %v355 = vadd.f32 0.0, %v354
      %v356 = vpop.f32.mrb[0].mxu0
      %v357 = vpop.f32.mrb[0].mxu0
      %v358 = vadd.f32 0.0, %v357
      %v359 = vpop.f32.mrb[0].mxu0
      %360 = vmatprep.mubr.bf16.mxu0 0
      %361 = vmatmul.mubr.bf16.gmra.mrb[0].mxu0 %v229
      %v362 = vpop.f32.mrb[0].mxu0
      %v363 = vadd.f32 0.0, %v362
      %v364 = vpop.f32.mrb[0].mxu0
      %v365 = vpop.f32.mrb[0].mxu0
      %v366 = vadd.f32 0.0, %v365
      %v367 = vpop.f32.mrb[0].mxu0
      %368 = vmatprep.mubr.bf16.mxu0 0
      %369 = vmatmul.mubr.bf16.gmra.mrb[0].mxu0 %v230
      %v370 = vpop.f32.mrb[0].mxu0
      %v371 = vadd.f32 0.0, %v370
      %v372 = vpop.f32.mrb[0].mxu0
      %v373 = vpop.f32.mrb[0].mxu0
      %v374 = vadd.f32 0.0, %v373
      %v375 = vpop.f32.mrb[0].mxu0
      %376 = vmatprep.mubr.bf16.mxu0 0
      %377 = vmatmul.mubr.bf16.gmra.mrb[0].mxu0 %v231
      %v378 = vpop.f32.mrb[0].mxu0
      %v379 = vadd.f32 0.0, %v378
      %v380 = vpop.f32.mrb[0].mxu0
      %v381 = vpop.f32.mrb[0].mxu0
      %v382 = vadd.f32 0.0, %v381
      %v383 = vpop.f32.mrb[0].mxu0
      %384 = vdwg.mxu0
      %v385 = vadd.f32 %v144, %v323
      %v386 = vadd.f32 %v145, %v326
      %v387 = vadd.f32 %v146, %v331
      %v388 = vadd.f32 %v147, %v334
      %v389 = vadd.f32 %v148, %v339
      %v390 = vadd.f32 %v149, %v342
      %v391 = vadd.f32 %v150, %v347
      %v392 = vadd.f32 %v151, %v350
      %v393 = vadd.f32 %v152, %v355
      %v394 = vadd.f32 %v153, %v358
      %v395 = vadd.f32 %v154, %v363
      %v396 = vadd.f32 %v155, %v366
      %v397 = vadd.f32 %v156, %v371
      %v398 = vadd.f32 %v157, %v374
      %v399 = vadd.f32 %v158, %v379
      %v400 = vadd.f32 %v159, %v382
      %401 = vst [vmem:[#allocation2] sm:$0xff] %v385
      %402 = vst [vmem:[#allocation2 + $0x8] sm:$0xff] %v386
      %403 = vst [vmem:[#allocation2 + $0x10] sm:$0xff] %v387
      %404 = vst [vmem:[#allocation2 + $0x18] sm:$0xff] %v388
      %405 = vst [vmem:[#allocation2 + $0x20] sm:$0xff] %v389
      %406 = vst [vmem:[#allocation2 + $0x28] sm:$0xff] %v390
      %407 = vst [vmem:[#allocation2 + $0x30] sm:$0xff] %v391
      %408 = vst [vmem:[#allocation2 + $0x38] sm:$0xff] %v392
      %409 = vst [vmem:[#allocation2 + $0x40] sm:$0xff] %v393
      %410 = vst [vmem:[#allocation2 + $0x48] sm:$0xff] %v394
      %411 = vst [vmem:[#allocation2 + $0x50] sm:$0xff] %v395
      %412 = vst [vmem:[#allocation2 + $0x58] sm:$0xff] %v396
      %413 = vst [vmem:[#allocation2 + $0x60] sm:$0xff] %v397
      %414 = vst [vmem:[#allocation2 + $0x68] sm:$0xff] %v398
      %415 = vst [vmem:[#allocation2 + $0x70] sm:$0xff] %v399
      %416 = vst [vmem:[#allocation2 + $0x78] sm:$0xff] %v400
    $region53: #{tpu_custom_call.1} parent=1 // pred_fallthru
      _
    // Predicated region
    $region54: #{tpu_custom_call.1} parent=1 // pred_check
      %p417 = pneg %p119
    $region55: #{tpu_custom_call.1} parent=1 // pred_check_branch
      %419 = sbr.rel (%p417) target = $region57
    $region56: #{tpu_custom_call.1} parent=1 // pred_region
      %v420 = vld [vmem:[#allocation2] sm:$0xff]
      %v421 = vld [vmem:[#allocation2 + $0x8] sm:$0xff]
      %v422 = vld [vmem:[#allocation2 + $0x10] sm:$0xff]
      %v423 = vld [vmem:[#allocation2 + $0x18] sm:$0xff]
      %v424 = vld [vmem:[#allocation2 + $0x20] sm:$0xff]
      %v425 = vld [vmem:[#allocation2 + $0x28] sm:$0xff]
      %v426 = vld [vmem:[#allocation2 + $0x30] sm:$0xff]
      %v427 = vld [vmem:[#allocation2 + $0x38] sm:$0xff]
      %v428 = vld [vmem:[#allocation2 + $0x40] sm:$0xff]
      %v429 = vld [vmem:[#allocation2 + $0x48] sm:$0xff]
      %v430 = vld [vmem:[#allocation2 + $0x50] sm:$0xff]
      %v431 = vld [vmem:[#allocation2 + $0x58] sm:$0xff]
      %v432 = vld [vmem:[#allocation2 + $0x60] sm:$0xff]
      %v433 = vld [vmem:[#allocation2 + $0x68] sm:$0xff]
      %v434 = vld [vmem:[#allocation2 + $0x70] sm:$0xff]
      %v435 = vld [vmem:[#allocation2 + $0x78] sm:$0xff]
      %v436 = vpack.c.bf16 %v421, %v420
      %v437 = vpack.c.bf16 %v423, %v422
      %v438 = vpack.c.bf16 %v425, %v424
      %v439 = vpack.c.bf16 %v427, %v426
      %v440 = vpack.c.bf16 %v429, %v428
      %v441 = vpack.c.bf16 %v431, %v430
      %v442 = vpack.c.bf16 %v433, %v432
      %v443 = vpack.c.bf16 %v435, %v434
      %v444 = vld [vmem:[#allocation12] sm:$0xf]
      %v445 = vld [vmem:[#allocation12 + $0x4] sm:$0xf]
      %v446 = vld [vmem:[#allocation12 + $0x8] sm:$0xf]
      %v447 = vld [vmem:[#allocation12 + $0xc] sm:$0xf]
      %v448 = vld [vmem:[#allocation12 + $0x10] sm:$0xf]
      %v449 = vld [vmem:[#allocation12 + $0x14] sm:$0xf]
      %v450 = vld [vmem:[#allocation12 + $0x18] sm:$0xf]
      %v451 = vld [vmem:[#allocation12 + $0x1c] sm:$0xf]
      %v452 = vld [vmem:[#allocation12 + $0x20] sm:$0xf]
      %v453 = vld [vmem:[#allocation12 + $0x24] sm:$0xf]
      %v454 = vld [vmem:[#allocation12 + $0x28] sm:$0xf]
      %v455 = vld [vmem:[#allocation12 + $0x2c] sm:$0xf]
      %v456 = vld [vmem:[#allocation12 + $0x30] sm:$0xf]
      %v457 = vld [vmem:[#allocation12 + $0x34] sm:$0xf]
      %v458 = vld [vmem:[#allocation12 + $0x38] sm:$0xf]
      %v459 = vld [vmem:[#allocation12 + $0x3c] sm:$0xf]
      %v460 = vld [vmem:[#allocation11] sm:$0xf]
      %v461 = vld [vmem:[#allocation11 + $0x4] sm:$0xf]
      %v462 = vld [vmem:[#allocation11 + $0x8] sm:$0xf]
      %v463 = vld [vmem:[#allocation11 + $0xc] sm:$0xf]
      %v464 = vld [vmem:[#allocation11 + $0x10] sm:$0xf]
      %v465 = vld [vmem:[#allocation11 + $0x14] sm:$0xf]
      %v466 = vld [vmem:[#allocation11 + $0x18] sm:$0xf]
      %v467 = vld [vmem:[#allocation11 + $0x1c] sm:$0xf]
      %v468 = vld [vmem:[#allocation11 + $0x20] sm:$0xf]
      %v469 = vld [vmem:[#allocation11 + $0x24] sm:$0xf]
      %v470 = vld [vmem:[#allocation11 + $0x28] sm:$0xf]
      %v471 = vld [vmem:[#allocation11 + $0x2c] sm:$0xf]
      %v472 = vld [vmem:[#allocation11 + $0x30] sm:$0xf]
      %v473 = vld [vmem:[#allocation11 + $0x34] sm:$0xf]
      %v474 = vld [vmem:[#allocation11 + $0x38] sm:$0xf]
      %v475 = vld [vmem:[#allocation11 + $0x3c] sm:$0xf]
      %v476 = vld [vmem:[#allocation14] sm:$0xf]
      %v477 = vld [vmem:[#allocation14 + $0x4] sm:$0xf]
      %v478 = vld [vmem:[#allocation14 + $0x8] sm:$0xf]
      %v479 = vld [vmem:[#allocation14 + $0xc] sm:$0xf]
      %v480 = vld [vmem:[#allocation14 + $0x10] sm:$0xf]
      %v481 = vld [vmem:[#allocation14 + $0x14] sm:$0xf]
      %v482 = vld [vmem:[#allocation14 + $0x18] sm:$0xf]
      %v483 = vld [vmem:[#allocation14 + $0x1c] sm:$0xf]
      %v484 = vld [vmem:[#allocation14 + $0x20] sm:$0xf]
      %v485 = vld [vmem:[#allocation14 + $0x24] sm:$0xf]
      %v486 = vld [vmem:[#allocation14 + $0x28] sm:$0xf]
      %v487 = vld [vmem:[#allocation14 + $0x2c] sm:$0xf]
      %v488 = vld [vmem:[#allocation14 + $0x30] sm:$0xf]
      %v489 = vld [vmem:[#allocation14 + $0x34] sm:$0xf]
      %v490 = vld [vmem:[#allocation14 + $0x38] sm:$0xf]
      %v491 = vld [vmem:[#allocation14 + $0x3c] sm:$0xf]
      %v508 = vunpack.c.l.b16 %v460
      %v509 = vunpack.c.l.b16 %v461
      %v510 = vunpack.c.l.b16 %v462
      %v511 = vunpack.c.l.b16 %v463
      %v512 = vunpack.c.l.b16 %v464
      %v513 = vunpack.c.l.b16 %v465
      %v514 = vunpack.c.l.b16 %v466
      %v515 = vunpack.c.l.b16 %v467
      %v516 = vunpack.c.l.b16 %v468
      %v517 = vunpack.c.l.b16 %v469
      %v518 = vunpack.c.l.b16 %v470
      %v519 = vunpack.c.l.b16 %v471
      %v520 = vunpack.c.l.b16 %v472
      %v521 = vunpack.c.l.b16 %v473
      %v522 = vunpack.c.l.b16 %v474
      %v523 = vunpack.c.l.b16 %v475
      %v524 = vpack.c.b16 %v509, %v508
      %v525 = vpack.c.b16 %v511, %v510
      %v526 = vpack.c.b16 %v513, %v512
      %v527 = vpack.c.b16 %v515, %v514
      %v528 = vpack.c.b16 %v517, %v516
      %v529 = vpack.c.b16 %v519, %v518
      %v530 = vpack.c.b16 %v521, %v520
      %v531 = vpack.c.b16 %v523, %v522
      %v556 = vunpack.c.l.b16 %v476
      %v557 = vunpack.c.l.b16 %v477
      %v558 = vunpack.c.l.b16 %v478
      %v559 = vunpack.c.l.b16 %v479
      %v560 = vunpack.c.l.b16 %v480
      %v561 = vunpack.c.l.b16 %v481
      %v562 = vunpack.c.l.b16 %v482
      %v563 = vunpack.c.l.b16 %v483
      %v564 = vunpack.c.l.b16 %v484
      %v565 = vunpack.c.l.b16 %v485
      %v566 = vunpack.c.l.b16 %v486
      %v567 = vunpack.c.l.b16 %v487
      %v568 = vunpack.c.l.b16 %v488
      %v569 = vunpack.c.l.b16 %v489
      %v570 = vunpack.c.l.b16 %v490
      %v571 = vunpack.c.l.b16 %v491
      %v572 = vpack.c.b16 %v557, %v556
      %v573 = vpack.c.b16 %v559, %v558
      %v574 = vpack.c.b16 %v561, %v560
      %v575 = vpack.c.b16 %v563, %v562
      %v576 = vpack.c.b16 %v565, %v564
      %v577 = vpack.c.b16 %v567, %v566
      %v578 = vpack.c.b16 %v569, %v568
      %v579 = vpack.c.b16 %v571, %v570
      %588 = vmatprep.subr.bf16.mxu0 0
      %589 = vmatpush1.bf16.msra.mxu0 %v572
      %590 = vmatprep.subr.bf16.mxu0 0
      %591 = vmatpush1.bf16.msra.mxu0 %v573
      %592 = vmatprep.subr.bf16.mxu0 0
      %593 = vmatpush1.bf16.msra.mxu0 %v574
      %594 = vmatprep.subr.bf16.mxu0 0
      %595 = vmatpush1.bf16.msra.mxu0 %v575
      %596 = vmatprep.subr.bf16.mxu0 0
      %597 = vmatpush1.bf16.msra.mxu0 %v576
      %598 = vmatprep.subr.bf16.mxu0 0
      %599 = vmatpush1.bf16.msra.mxu0 %v577
      %600 = vmatprep.subr.bf16.mxu0 0
      %601 = vmatpush1.bf16.msra.mxu0 %v578
      %602 = vmatprep.subr.bf16.mxu0 0
      %603 = vmatpush1.bf16.msra.mxu0 %v579
      %604 = vmatprep.subr.bf16.mxu0 0
      %605 = vmatpush1.bf16.msra.mxu0 0
      %606 = vmatprep.subr.bf16.mxu0 0
      %607 = vmatpush1.bf16.msra.mxu0 0
      %608 = vmatprep.subr.bf16.mxu0 0
      %609 = vmatpush1.bf16.msra.mxu0 0
      %610 = vmatprep.subr.bf16.mxu0 0
      %611 = vmatpush1.bf16.msra.mxu0 0
      %612 = vmatprep.subr.bf16.mxu0 0
      %613 = vmatpush1.bf16.msra.mxu0 0
      %614 = vmatprep.subr.bf16.mxu0 0
      %615 = vmatpush1.bf16.msra.mxu0 0
      %616 = vmatprep.subr.bf16.mxu0 0
      %617 = vmatpush1.bf16.msra.mxu0 0
      %618 = vmatprep.subr.bf16.mxu0 0
      %619 = vmatpush1.bf16.msra.mxu0 0
      %620 = vmatprep.mubr.bf16.mxu0 0
      %621 = vmatmul.mubr.bf16.gmra.mrb[0].mxu0 %v524
      %v622 = vpop.f32.mrb[0].mxu0
      %v623 = vadd.f32 0.0, %v622
      %v624 = vpop.f32.mrb[0].mxu0
      %v625 = vpop.f32.mrb[0].mxu0
      %v626 = vadd.f32 0.0, %v625
      %v627 = vpop.f32.mrb[0].mxu0
      %628 = vmatprep.mubr.bf16.mxu0 0
      %629 = vmatmul.mubr.bf16.gmra.mrb[0].mxu0 %v525
      %v630 = vpop.f32.mrb[0].mxu0
      %v631 = vadd.f32 0.0, %v630
      %v632 = vpop.f32.mrb[0].mxu0
      %v633 = vpop.f32.mrb[0].mxu0
      %v634 = vadd.f32 0.0, %v633
      %v635 = vpop.f32.mrb[0].mxu0
      %636 = vmatprep.mubr.bf16.mxu0 0
      %637 = vmatmul.mubr.bf16.gmra.mrb[0].mxu0 %v526
      %v638 = vpop.f32.mrb[0].mxu0
      %v639 = vadd.f32 0.0, %v638
      %v640 = vpop.f32.mrb[0].mxu0
      %v641 = vpop.f32.mrb[0].mxu0
      %v642 = vadd.f32 0.0, %v641
      %v643 = vpop.f32.mrb[0].mxu0
      %644 = vmatprep.mubr.bf16.mxu0 0
      %645 = vmatmul.mubr.bf16.gmra.mrb[0].mxu0 %v527
      %v646 = vpop.f32.mrb[0].mxu0
      %v647 = vadd.f32 0.0, %v646
      %v648 = vpop.f32.mrb[0].mxu0
      %v649 = vpop.f32.mrb[0].mxu0
      %v650 = vadd.f32 0.0, %v649
      %v651 = vpop.f32.mrb[0].mxu0
      %652 = vmatprep.mubr.bf16.mxu0 0
      %653 = vmatmul.mubr.bf16.gmra.mrb[0].mxu0 %v528
      %v654 = vpop.f32.mrb[0].mxu0
      %v655 = vadd.f32 0.0, %v654
      %v656 = vpop.f32.mrb[0].mxu0
      %v657 = vpop.f32.mrb[0].mxu0
      %v658 = vadd.f32 0.0, %v657
      %v659 = vpop.f32.mrb[0].mxu0
      %660 = vmatprep.mubr.bf16.mxu0 0
      %661 = vmatmul.mubr.bf16.gmra.mrb[0].mxu0 %v529
      %v662 = vpop.f32.mrb[0].mxu0
      %v663 = vadd.f32 0.0, %v662
      %v664 = vpop.f32.mrb[0].mxu0
      %v665 = vpop.f32.mrb[0].mxu0
      %v666 = vadd.f32 0.0, %v665
      %v667 = vpop.f32.mrb[0].mxu0
      %668 = vmatprep.mubr.bf16.mxu0 0
      %669 = vmatmul.mubr.bf16.gmra.mrb[0].mxu0 %v530
      %v670 = vpop.f32.mrb[0].mxu0
      %v671 = vadd.f32 0.0, %v670
      %v672 = vpop.f32.mrb[0].mxu0
      %v673 = vpop.f32.mrb[0].mxu0
      %v674 = vadd.f32 0.0, %v673
      %v675 = vpop.f32.mrb[0].mxu0
      %676 = vmatprep.mubr.bf16.mxu0 0
      %677 = vmatmul.mubr.bf16.gmra.mrb[0].mxu0 %v531
      %v678 = vpop.f32.mrb[0].mxu0
      %v679 = vadd.f32 0.0, %v678
      %v680 = vpop.f32.mrb[0].mxu0
      %v681 = vpop.f32.mrb[0].mxu0
      %v682 = vadd.f32 0.0, %v681
      %v683 = vpop.f32.mrb[0].mxu0
      %684 = vdwg.mxu0
      %v701 = vunpack.c.l.b16 %v444
      %v702 = vunpack.c.l.b16 %v445
      %v703 = vunpack.c.l.b16 %v446
      %v704 = vunpack.c.l.b16 %v447
      %v705 = vunpack.c.l.b16 %v448
      %v706 = vunpack.c.l.b16 %v449
      %v707 = vunpack.c.l.b16 %v450
      %v708 = vunpack.c.l.b16 %v451
      %v709 = vunpack.c.l.b16 %v452
      %v710 = vunpack.c.l.b16 %v453
      %v711 = vunpack.c.l.b16 %v454
      %v712 = vunpack.c.l.b16 %v455
      %v713 = vunpack.c.l.b16 %v456
      %v714 = vunpack.c.l.b16 %v457
      %v715 = vunpack.c.l.b16 %v458
      %v716 = vunpack.c.l.b16 %v459
      %v717 = vpack.c.b16 %v702, %v701
      %v718 = vpack.c.b16 %v704, %v703
      %v719 = vpack.c.b16 %v706, %v705
      %v720 = vpack.c.b16 %v708, %v707
      %v721 = vpack.c.b16 %v710, %v709
      %v722 = vpack.c.b16 %v712, %v711
      %v723 = vpack.c.b16 %v714, %v713
      %v724 = vpack.c.b16 %v716, %v715
      %733 = vmatprep.subr.bf16.mxu0 0
      %734 = vmatpush1.bf16.msra.mxu0 %v717
      %735 = vmatprep.subr.bf16.mxu0 0
      %736 = vmatpush1.bf16.msra.mxu0 %v718
      %737 = vmatprep.subr.bf16.mxu0 0
      %738 = vmatpush1.bf16.msra.mxu0 %v719
      %739 = vmatprep.subr.bf16.mxu0 0
      %740 = vmatpush1.bf16.msra.mxu0 %v720
      %741 = vmatprep.subr.bf16.mxu0 0
      %742 = vmatpush1.bf16.msra.mxu0 %v721
      %743 = vmatprep.subr.bf16.mxu0 0
      %744 = vmatpush1.bf16.msra.mxu0 %v722
      %745 = vmatprep.subr.bf16.mxu0 0
      %746 = vmatpush1.bf16.msra.mxu0 %v723
      %747 = vmatprep.subr.bf16.mxu0 0
      %748 = vmatpush1.bf16.msra.mxu0 %v724
      %749 = vmatprep.subr.bf16.mxu0 0
      %750 = vmatpush1.bf16.msra.mxu0 0
      %751 = vmatprep.subr.bf16.mxu0 0
      %752 = vmatpush1.bf16.msra.mxu0 0
      %753 = vmatprep.subr.bf16.mxu0 0
      %754 = vmatpush1.bf16.msra.mxu0 0
      %755 = vmatprep.subr.bf16.mxu0 0
      %756 = vmatpush1.bf16.msra.mxu0 0
      %757 = vmatprep.subr.bf16.mxu0 0
      %758 = vmatpush1.bf16.msra.mxu0 0
      %759 = vmatprep.subr.bf16.mxu0 0
      %760 = vmatpush1.bf16.msra.mxu0 0
      %761 = vmatprep.subr.bf16.mxu0 0
      %762 = vmatpush1.bf16.msra.mxu0 0
      %763 = vmatprep.subr.bf16.mxu0 0
      %764 = vmatpush1.bf16.msra.mxu0 0
      %765 = vmatprep.mubr.bf16.mxu0 0
      %766 = vmatmul.mubr.bf16.gmra.mrb[0].mxu0 %v436
      %v767 = vpop.f32.mrb[0].mxu0
      %v768 = vadd.f32 %v623, %v767
      %v769 = vpop.f32.mrb[0].mxu0
      %v770 = vpop.f32.mrb[0].mxu0
      %v771 = vadd.f32 %v626, %v770
      %v772 = vpop.f32.mrb[0].mxu0
      %773 = vmatprep.mubr.bf16.mxu0 0
      %774 = vmatmul.mubr.bf16.gmra.mrb[0].mxu0 %v437
      %v775 = vpop.f32.mrb[0].mxu0
      %v776 = vadd.f32 %v631, %v775
      %v777 = vpop.f32.mrb[0].mxu0
      %v778 = vpop.f32.mrb[0].mxu0
      %v779 = vadd.f32 %v634, %v778
      %v780 = vpop.f32.mrb[0].mxu0
      %781 = vmatprep.mubr.bf16.mxu0 0
      %782 = vmatmul.mubr.bf16.gmra.mrb[0].mxu0 %v438
      %v783 = vpop.f32.mrb[0].mxu0
      %v784 = vadd.f32 %v639, %v783
      %v785 = vpop.f32.mrb[0].mxu0
      %v786 = vpop.f32.mrb[0].mxu0
      %v787 = vadd.f32 %v642, %v786
      %v788 = vpop.f32.mrb[0].mxu0
      %789 = vmatprep.mubr.bf16.mxu0 0
      %790 = vmatmul.mubr.bf16.gmra.mrb[0].mxu0 %v439
      %v791 = vpop.f32.mrb[0].mxu0
      %v792 = vadd.f32 %v647, %v791
      %v793 = vpop.f32.mrb[0].mxu0
      %v794 = vpop.f32.mrb[0].mxu0
      %v795 = vadd.f32 %v650, %v794
      %v796 = vpop.f32.mrb[0].mxu0
      %797 = vmatprep.mubr.bf16.mxu0 0
      %798 = vmatmul.mubr.bf16.gmra.mrb[0].mxu0 %v440
      %v799 = vpop.f32.mrb[0].mxu0
      %v800 = vadd.f32 %v655, %v799
      %v801 = vpop.f32.mrb[0].mxu0
      %v802 = vpop.f32.mrb[0].mxu0
      %v803 = vadd.f32 %v658, %v802
      %v804 = vpop.f32.mrb[0].mxu0
      %805 = vmatprep.mubr.bf16.mxu0 0
      %806 = vmatmul.mubr.bf16.gmra.mrb[0].mxu0 %v441
      %v807 = vpop.f32.mrb[0].mxu0
      %v808 = vadd.f32 %v663, %v807
      %v809 = vpop.f32.mrb[0].mxu0
      %v810 = vpop.f32.mrb[0].mxu0
      %v811 = vadd.f32 %v666, %v810
      %v812 = vpop.f32.mrb[0].mxu0
      %813 = vmatprep.mubr.bf16.mxu0 0
      %814 = vmatmul.mubr.bf16.gmra.mrb[0].mxu0 %v442
      %v815 = vpop.f32.mrb[0].mxu0
      %v816 = vadd.f32 %v671, %v815
      %v817 = vpop.f32.mrb[0].mxu0
      %v818 = vpop.f32.mrb[0].mxu0
      %v819 = vadd.f32 %v674, %v818
      %v820 = vpop.f32.mrb[0].mxu0
      %821 = vmatprep.mubr.bf16.mxu0 0
      %822 = vmatmul.mubr.bf16.gmra.mrb[0].mxu0 %v443
      %v823 = vpop.f32.mrb[0].mxu0
      %v824 = vadd.f32 %v679, %v823
      %v825 = vpop.f32.mrb[0].mxu0
      %v826 = vpop.f32.mrb[0].mxu0
      %v827 = vadd.f32 %v682, %v826
      %v828 = vpop.f32.mrb[0].mxu0
      %829 = vdwg.mxu0
      %v830 = vld [vmem:[%s7] sm:$0x1]
      %v832 = vlaneseq
      %v833 = vshrl.u32 %v832, 7
      %v834 = vsub.s32 0, %v833
      %v835 = vrot.slane %v830, %v834
      %v837 = vadd.f32 %v768, %v835
      %v838 = vadd.f32 %v771, %v835
      %v839 = vadd.f32 %v776, %v835
      %v840 = vadd.f32 %v779, %v835
      %v841 = vadd.f32 %v784, %v835
      %v842 = vadd.f32 %v787, %v835
      %v843 = vadd.f32 %v792, %v835
      %v844 = vadd.f32 %v795, %v835
      %v845 = vadd.f32 %v800, %v835
      %v846 = vadd.f32 %v803, %v835
      %v847 = vadd.f32 %v808, %v835
      %v848 = vadd.f32 %v811, %v835
      %v849 = vadd.f32 %v816, %v835
      %v850 = vadd.f32 %v819, %v835
      %v851 = vadd.f32 %v824, %v835
      %v852 = vadd.f32 %v827, %v835
      %v853 = vmax.f32 %v837, 0.0
      %v854 = vmax.f32 %v838, 0.0
      %v855 = vmax.f32 %v839, 0.0
      %v856 = vmax.f32 %v840, 0.0
      %v857 = vmax.f32 %v841, 0.0
      %v858 = vmax.f32 %v842, 0.0
      %v859 = vmax.f32 %v843, 0.0
      %v860 = vmax.f32 %v844, 0.0
      %v861 = vmax.f32 %v845, 0.0
      %v862 = vmax.f32 %v846, 0.0
      %v863 = vmax.f32 %v847, 0.0
      %v864 = vmax.f32 %v848, 0.0
      %v865 = vmax.f32 %v849, 0.0
      %v866 = vmax.f32 %v850, 0.0
      %v867 = vmax.f32 %v851, 0.0
      %v868 = vmax.f32 %v852, 0.0
      %v869 = vpack.c.bf16 %v854, %v853
      %v870 = vpack.c.bf16 %v856, %v855
      %v871 = vpack.c.bf16 %v858, %v857
      %v872 = vpack.c.bf16 %v860, %v859
      %v873 = vpack.c.bf16 %v862, %v861
      %v874 = vpack.c.bf16 %v864, %v863
      %v875 = vpack.c.bf16 %v866, %v865
      %v876 = vpack.c.bf16 %v868, %v867
      %v885 = vunpack.c.l.b16 %v869
      %v886 = vunpack.c.h.b16 %v869
      %v887 = vunpack.c.l.b16 %v870
      %v888 = vunpack.c.h.b16 %v870
      %v889 = vunpack.c.l.b16 %v871
      %v890 = vunpack.c.h.b16 %v871
      %v891 = vunpack.c.l.b16 %v872
      %v892 = vunpack.c.h.b16 %v872
      %v893 = vunpack.c.l.b16 %v873
      %v894 = vunpack.c.h.b16 %v873
      %v895 = vunpack.c.l.b16 %v874
      %v896 = vunpack.c.h.b16 %v874
      %v897 = vunpack.c.l.b16 %v875
      %v898 = vunpack.c.h.b16 %v875
      %v899 = vunpack.c.l.b16 %v876
      %v900 = vunpack.c.h.b16 %v876
      %v901 = vpack.c.b16 %v885, %v885
      %v902 = vpack.c.b16 %v886, %v886
      %v903 = vpack.c.b16 %v887, %v887
      %v904 = vpack.c.b16 %v888, %v888
      %v905 = vpack.c.b16 %v889, %v889
      %v906 = vpack.c.b16 %v890, %v890
      %v907 = vpack.c.b16 %v891, %v891
      %v908 = vpack.c.b16 %v892, %v892
      %v909 = vpack.c.b16 %v893, %v893
      %v910 = vpack.c.b16 %v894, %v894
      %v911 = vpack.c.b16 %v895, %v895
      %v912 = vpack.c.b16 %v896, %v896
      %v913 = vpack.c.b16 %v897, %v897
      %v914 = vpack.c.b16 %v898, %v898
      %v915 = vpack.c.b16 %v899, %v899
      %v916 = vpack.c.b16 %v900, %v900
      %933 = vst [vmem:[#allocation15] sm:$0xf] %v901
      %934 = vst [vmem:[#allocation15 + $0x4] sm:$0xf] %v902
      %935 = vst [vmem:[#allocation15 + $0x8] sm:$0xf] %v903
      %936 = vst [vmem:[#allocation15 + $0xc] sm:$0xf] %v904
      %937 = vst [vmem:[#allocation15 + $0x10] sm:$0xf] %v905
      %938 = vst [vmem:[#allocation15 + $0x14] sm:$0xf] %v906
      %939 = vst [vmem:[#allocation15 + $0x18] sm:$0xf] %v907
      %940 = vst [vmem:[#allocation15 + $0x1c] sm:$0xf] %v908
      %941 = vst [vmem:[#allocation15 + $0x20] sm:$0xf] %v909
      %942 = vst [vmem:[#allocation15 + $0x24] sm:$0xf] %v910
      %943 = vst [vmem:[#allocation15 + $0x28] sm:$0xf] %v911
      %944 = vst [vmem:[#allocation15 + $0x2c] sm:$0xf] %v912
      %945 = vst [vmem:[#allocation15 + $0x30] sm:$0xf] %v913
      %946 = vst [vmem:[#allocation15 + $0x34] sm:$0xf] %v914
      %947 = vst [vmem:[#allocation15 + $0x38] sm:$0xf] %v915
      %948 = vst [vmem:[#allocation15 + $0x3c] sm:$0xf] %v916
    $region57: #{tpu_custom_call.1} parent=1 // pred_fallthru
      _
    // Predicated region
    $region58: #{tpu_custom_call.1} parent=1 // pred_check
      _
    $region59: #{tpu_custom_call.1} parent=1 // pred_check_branch
      %950 = sbr.rel (0) target = $region61
    $region60: #{tpu_custom_call.1} parent=1 // pred_region
      %s952 = ssub.s32 1024, 1024
      %953 = vsyncadd [#allocation8], %s952
      %s954 = sshll.u32 [#allocation15], 4
      %s955 = int_to_ptr.vmem [resolvable:$true] %s954
      %960 = dma.vmem_to_hbm [thread:$0]  %s955, 1024, %s8, [#allocation8], 64, 64, 4
    $region61: #{tpu_custom_call.1} parent=1 // pred_fallthru
      _
    // Predicated region
    $region62: #{tpu_custom_call.1} parent=1 // pred_check
      _
    $region63: #{tpu_custom_call.1} parent=1 // pred_check_branch
      %962 = sbr.rel (0) target = $region65
    $region64: #{tpu_custom_call.1} parent=1 // pred_region
      %963 = dma.done [#allocation8], 1024
    $region65: #{tpu_custom_call.1} parent=1 // pred_fallthru
      _
    %964 = vsyncpa [#allocation7], 1
    %965 = vsyncpa [#allocation10], 1
    %966 = vsyncpa [#allocation13], 1
    %967 = vsyncpa [#allocation8], 1

</llo_original>
